<compile_context>
chip_gen: v7x
topology: tpu7x:2x2x1
jax: 0.10.0
libtpu: 0.0.40
codegen_flags: <defaults>
</compile_context>

<pallas_src>
import functools

import jax
import jax.numpy as jnp
from jax.experimental import pallas as pl
from jax.experimental.pallas import tpu as pltpu

NUM_CLASS = 4
DEC_DIM = 32
STAGE_CFG = [
    dict(dim=32, heads=1, k=7, s=4, p=3, mlp_ratio=2),  # overlap patch embed 7/4/3
    dict(dim=64, heads=2, k=3, s=2, p=1, mlp_ratio=2),  # overlap patch embed 3/2/1
]

_VMEM_LIMIT = 48 * 1024 * 1024  # leaves headroom below v7x's 64 MiB/TC VMEM


def _cparams(sem):
    return pltpu.CompilerParams(dimension_semantics=sem,
                                vmem_limit_bytes=_VMEM_LIMIT)


def _pick_tile(m, target=512):
    """Largest row-tile <= target that divides m and is a multiple of 8; else whole m."""
    if m <= target:
        return m
    for t in (target, 384, 256, 128, 64, 32, 16, 8):
        if m % t == 0:
            return t
    return m


def _row_grid(m, target=512):
    tm = _pick_tile(m, target)
    return tm, (m // tm,)


# ---------------------------------------------------------------------------
# Pallas kernels (MXU ops take bf16 operands; accumulation & epilogues stay f32)
# ---------------------------------------------------------------------------
def _mm_ln_kernel(x_ref, w_ref, b_ref, g_ref, bln_ref, o_ref, *, eps):
    """(x @ w + b) -> LayerNorm. Used for the overlap patch embedding."""
    x = x_ref[...]
    if x.dtype != jnp.bfloat16:
        x = x.astype(jnp.bfloat16)
    acc = jnp.dot(x, w_ref[...], preferred_element_type=jnp.float32) + b_ref[...]
    mu = jnp.mean(acc, axis=-1, keepdims=True)
    var = jnp.mean((acc - mu) ** 2, axis=-1, keepdims=True)
    y = (acc - mu) * jax.lax.rsqrt(var + eps)
    o_ref[...] = (y * g_ref[...] + bln_ref[...]).astype(o_ref.dtype)


def _ln_mm_kernel(x_ref, g_ref, bln_ref, w_ref, b_ref, o_ref, *, eps):
    """LayerNorm(x) @ w + b. Used for the fused QKV projection and Mix-FFN fc1."""
    x = x_ref[...].astype(jnp.float32)
    mu = jnp.mean(x, axis=-1, keepdims=True)
    var = jnp.mean((x - mu) ** 2, axis=-1, keepdims=True)
    h = (x - mu) * jax.lax.rsqrt(var + eps) * g_ref[...] + bln_ref[...]
    acc = jnp.dot(h.astype(jnp.bfloat16), w_ref[...],
                  preferred_element_type=jnp.float32) + b_ref[...]
    o_ref[...] = acc.astype(o_ref.dtype)


def _mm_res_kernel(x_ref, w_ref, b_ref, res_ref, o_ref):
    """x @ w + b + residual. Used for the attention output proj and Mix-FFN fc2."""
    x = x_ref[...]
    if x.dtype != jnp.bfloat16:
        x = x.astype(jnp.bfloat16)
    acc = jnp.dot(x, w_ref[...], preferred_element_type=jnp.float32) + b_ref[...]
    acc = acc + res_ref[...].astype(jnp.float32)
    o_ref[...] = acc.astype(o_ref.dtype)


def _ln_kernel(x_ref, g_ref, b_ref, o_ref, *, eps):
    x = x_ref[...].astype(jnp.float32)
    mu = jnp.mean(x, axis=-1, keepdims=True)
    var = jnp.mean((x - mu) ** 2, axis=-1, keepdims=True)
    y = (x - mu) * jax.lax.rsqrt(var + eps)
    o_ref[...] = (y * g_ref[...] + b_ref[...]).astype(o_ref.dtype)


def _attn_kernel(q_ref, k_ref, v_ref, o_ref):
    # scale is pre-folded into Wq/bq; scores contract on stored layouts (no .T).
    q = q_ref[0]
    k = k_ref[0]
    v = v_ref[0]
    s = jax.lax.dot_general(q, k, (((1,), (1,)), ((), ())),
                            preferred_element_type=jnp.float32)
    s = s - jnp.max(s, axis=-1, keepdims=True)
    p = jnp.exp(s)
    p = p * pl.reciprocal(jnp.sum(p, axis=-1, keepdims=True), approx=False)
    o_ref[0] = jnp.dot(p.astype(v.dtype), v,
                       preferred_element_type=jnp.float32).astype(o_ref.dtype)


def _dwconv_kernel(x_ref, w_ref, b_ref, o_ref, *, H, W):
    # x_ref: (1, H+2, W+2, C) zero-padded bf16 input; w_ref: (9, C) f32; b_ref: (1, C) f32
    # TODO(synk): at real resolutions, tile H with a 1-row halo and use pltpu.roll for the
    #             dx shifts instead of 9 whole-tile slices.
    acc = jnp.zeros(o_ref.shape, jnp.float32)
    for dy in range(3):
        for dx in range(3):
            tap = x_ref[:, dy:dy + H, dx:dx + W, :].astype(jnp.float32)
            acc = acc + tap * w_ref[dy * 3 + dx, :]
    acc = acc + b_ref[0, :]
    # TODO(synk): HF SegFormer uses exact (erf) GELU; tanh approximation kept for portability.
    o_ref[...] = jax.nn.gelu(acc).astype(o_ref.dtype)


def _decode_kernel(*refs, n_stages):
    """Fused all-MLP decode head: sum_i(x_i @ Wfold_i) + b -> ReLU -> @ Wcls + bcls."""
    x_refs = refs[:n_stages]
    w_refs = refs[n_stages:2 * n_stages]
    b_ref, wc_ref, bc_ref, o_ref = refs[2 * n_stages:]
    acc = b_ref[...].astype(jnp.float32)
    for xr, wr in zip(x_refs, w_refs):
        acc = acc + jnp.dot(xr[...].astype(jnp.bfloat16), wr[...],
                            preferred_element_type=jnp.float32)
    # TODO(synk): BatchNorm2d (running stats) in HF linear_fuse has no clean kernel
    #             equivalent for a synthetic init; 1x1-conv + ReLU only.
    acc = jnp.maximum(acc, 0.0)
    out = jnp.dot(acc.astype(jnp.bfloat16), wc_ref[...],
                  preferred_element_type=jnp.float32) + bc_ref[...]
    # TODO(synk): NUM_CLASS=4 output is lane-sparse; acceptable as the final tiny write.
    o_ref[...] = out.astype(o_ref.dtype)


def _ce_kernel(logits_ref, labels_ref, sum_ref, cnt_ref):
    # cross-entropy with ignore_index=255 (HF semantic_loss_ignore_index),
    # accumulated across the M grid (output blocks are resident).
    i = pl.program_id(0)

    @pl.when(i == 0)
    def _():
        sum_ref[...] = jnp.zeros_like(sum_ref)
        cnt_ref[...] = jnp.zeros_like(cnt_ref)

    x = logits_ref[...].astype(jnp.float32)                  # (tm, NUM_CLASS)
    m = jnp.max(x, axis=-1, keepdims=True)
    lse = jnp.log(jnp.sum(jnp.exp(x - m), axis=-1, keepdims=True)) + m
    lab = labels_ref[...]                                    # (tm, 1) int32
    cls = jax.lax.broadcasted_iota(jnp.int32, x.shape, 1)
    picked = jnp.sum(jnp.where(cls == lab, x, 0.0), axis=-1, keepdims=True)
    valid = (lab != 255).astype(jnp.float32)
    per = (lse - picked) * valid
    sum_ref[...] += jnp.sum(per).reshape(1, 1)
    cnt_ref[...] += jnp.sum(valid).reshape(1, 1)


# ---------------------------------------------------------------------------
# Pallas wrappers (row-gridded, double-buffered, "parallel" over tokens)
# ---------------------------------------------------------------------------
def pallas_matmul_ln(x, w, b, g, bln, eps=1e-6):
    M, K = x.shape
    N = w.shape[1]
    tm, grid = _row_grid(M)
    return pl.pallas_call(
        functools.partial(_mm_ln_kernel, eps=eps),
        grid=grid,
        in_specs=[pl.BlockSpec((tm, K), lambda i: (i, 0)),
                  pl.BlockSpec((K, N), lambda i: (0, 0)),
                  pl.BlockSpec((1, N), lambda i: (0, 0)),
                  pl.BlockSpec((1, N), lambda i: (0, 0)),
                  pl.BlockSpec((1, N), lambda i: (0, 0))],
        out_specs=pl.BlockSpec((tm, N), lambda i: (i, 0)),
        out_shape=jax.ShapeDtypeStruct((M, N), jnp.float32),
        compiler_params=_cparams(("parallel",)),
    )(x, w, b.reshape(1, N), g.reshape(1, N), bln.reshape(1, N))


def pallas_ln_matmul(x, g, bln, w, b, out_dtype=jnp.bfloat16, eps=1e-6):
    M, K = x.shape
    N = w.shape[1]
    tm, grid = _row_grid(M)
    return pl.pallas_call(
        functools.partial(_ln_mm_kernel, eps=eps),
        grid=grid,
        in_specs=[pl.BlockSpec((tm, K), lambda i: (i, 0)),
                  pl.BlockSpec((1, K), lambda i: (0, 0)),
                  pl.BlockSpec((1, K), lambda i: (0, 0)),
                  pl.BlockSpec((K, N), lambda i: (0, 0)),
                  pl.BlockSpec((1, N), lambda i: (0, 0))],
        out_specs=pl.BlockSpec((tm, N), lambda i: (i, 0)),
        out_shape=jax.ShapeDtypeStruct((M, N), out_dtype),
        compiler_params=_cparams(("parallel",)),
    )(x, g.reshape(1, K), bln.reshape(1, K), w, b.reshape(1, N))


def pallas_matmul_res(x, w, b, res):
    M, K = x.shape
    N = w.shape[1]
    tm, grid = _row_grid(M)
    return pl.pallas_call(
        _mm_res_kernel,
        grid=grid,
        in_specs=[pl.BlockSpec((tm, K), lambda i: (i, 0)),
                  pl.BlockSpec((K, N), lambda i: (0, 0)),
                  pl.BlockSpec((1, N), lambda i: (0, 0)),
                  pl.BlockSpec((tm, N), lambda i: (i, 0))],
        out_specs=pl.BlockSpec((tm, N), lambda i: (i, 0)),
        out_shape=jax.ShapeDtypeStruct((M, N), jnp.float32),
        compiler_params=_cparams(("parallel",)),
    )(x, w, b.reshape(1, N), res)


def pallas_layernorm(x, g, b, eps=1e-6):
    M, C = x.shape
    tm, grid = _row_grid(M)
    return pl.pallas_call(
        functools.partial(_ln_kernel, eps=eps),
        grid=grid,
        in_specs=[pl.BlockSpec((tm, C), lambda i: (i, 0)),
                  pl.BlockSpec((1, C), lambda i: (0, 0)),
                  pl.BlockSpec((1, C), lambda i: (0, 0))],
        out_specs=pl.BlockSpec((tm, C), lambda i: (i, 0)),
        out_shape=jax.ShapeDtypeStruct((M, C), jnp.float32),
        compiler_params=_cparams(("parallel",)),
    )(x, g.reshape(1, C), b.reshape(1, C))


def pallas_attention(q, k, v):
    BH, N, D = q.shape
    spec = pl.BlockSpec((1, N, D), lambda i: (i, 0, 0))
    return pl.pallas_call(
        _attn_kernel,
        grid=(BH,),
        in_specs=[spec, spec, spec],
        out_specs=spec,
        out_shape=jax.ShapeDtypeStruct((BH, N, D), jnp.bfloat16),
        compiler_params=_cparams(("parallel",)),
    )(q, k, v)


def pallas_dwconv3x3_gelu(x_bhwc, w9c, bias):
    B, H, W, C = x_bhwc.shape
    xp = jnp.pad(x_bhwc, ((0, 0), (1, 1), (1, 1), (0, 0)))
    return pl.pallas_call(
        functools.partial(_dwconv_kernel, H=H, W=W),
        grid=(B,),
        in_specs=[pl.BlockSpec((1, H + 2, W + 2, C), lambda b: (b, 0, 0, 0)),
                  pl.BlockSpec((9, C), lambda b: (0, 0)),
                  pl.BlockSpec((1, C), lambda b: (0, 0))],
        out_specs=pl.BlockSpec((1, H, W, C), lambda b: (b, 0, 0, 0)),
        out_shape=jax.ShapeDtypeStruct((B, H, W, C), jnp.bfloat16),
        compiler_params=_cparams(("parallel",)),
    )(xp, w9c, bias.reshape(1, C))


def pallas_decode_head(xs, ws, b, wc, bc):
    M = xs[0].shape[0]
    n = len(xs)
    tm, grid = _row_grid(M)
    in_specs = [pl.BlockSpec((tm, x.shape[1]), lambda i: (i, 0)) for x in xs]
    in_specs += [pl.BlockSpec(w.shape, lambda i: (0, 0)) for w in ws]
    in_specs += [pl.BlockSpec((1, b.shape[-1]), lambda i: (0, 0)),
                 pl.BlockSpec(wc.shape, lambda i: (0, 0)),
                 pl.BlockSpec((1, bc.shape[-1]), lambda i: (0, 0))]
    return pl.pallas_call(
        functools.partial(_decode_kernel, n_stages=n),
        grid=grid,
        in_specs=in_specs,
        out_specs=pl.BlockSpec((tm, wc.shape[1]), lambda i: (i, 0)),
        out_shape=jax.ShapeDtypeStruct((M, wc.shape[1]), jnp.float32),
        compiler_params=_cparams(("parallel",)),
    )(*xs, *ws, b.reshape(1, -1), wc, bc.reshape(1, -1))


def pallas_cross_entropy(logits_flat, labels_flat):
    M, C = logits_flat.shape
    tm = min(M, 1024)
    if M % tm:
        pad = (-M) % tm
        # padded rows use ignore label 255 -> excluded from both sum and count
        logits_flat = jnp.pad(logits_flat, ((0, pad), (0, 0)))
        labels_flat = jnp.pad(labels_flat, ((0, pad),), constant_values=255)
        M += pad
    grid = (M // tm,)
    s, c = pl.pallas_call(
        _ce_kernel,
        grid=grid,
        in_specs=[pl.BlockSpec((tm, C), lambda i: (i, 0)),
                  pl.BlockSpec((tm, 1), lambda i: (i, 0))],
        out_specs=(pl.BlockSpec((1, 1), lambda i: (0, 0)),
                   pl.BlockSpec((1, 1), lambda i: (0, 0))),
        out_shape=(jax.ShapeDtypeStruct((1, 1), jnp.float32),
                   jax.ShapeDtypeStruct((1, 1), jnp.float32)),
        compiler_params=_cparams(("arbitrary",)),  # accumulator output across M grid
    )(logits_flat, labels_flat.reshape(M, 1).astype(jnp.int32))
    return s[0, 0] / jnp.maximum(c[0, 0], 1.0)


# ---------------------------------------------------------------------------
# Glue: im2col for the overlap patch-embedding conv (matmul runs in Pallas)
# TODO(synk): at real resolutions, fuse the window read into the matmul's input
#             pipeline via a BlockSpec index_map instead of materializing patches.
# ---------------------------------------------------------------------------
def im2col(x_nchw, k, s, p):
    x = x_nchw.astype(jnp.bfloat16)            # bf16 patches -> half the HBM traffic
    B, C, H, W = x.shape
    xp = jnp.pad(x, ((0, 0), (0, 0), (p, p), (p, p)))
    Ho = (H + 2 * p - k) // s + 1
    Wo = (W + 2 * p - k) // s + 1
    taps = []
    for di in range(k):
        for dj in range(k):
            taps.append(xp[:, :, di:di + (Ho - 1) * s + 1:s, dj:dj + (Wo - 1) * s + 1:s])
    patches = jnp.stack(taps, axis=-1)                       # [B, C, Ho, Wo, k*k]
    patches = patches.transpose(0, 2, 3, 1, 4).reshape(B * Ho * Wo, C * k * k)
    return patches, Ho, Wo


# ---------------------------------------------------------------------------
# Parameters (deterministic synthetic init) + offline folding / bf16 prep
# ---------------------------------------------------------------------------
def init_params(key):
    keys = iter(jax.random.split(key, 128))

    def nrm(*shape, scale=0.02):
        return scale * jax.random.normal(next(keys), shape, jnp.float32)

    stages = []
    cin = 3
    for cfg in STAGE_CFG:
        d, hid = cfg["dim"], cfg["dim"] * cfg["mlp_ratio"]
        st = dict(
            patch_w=nrm(cin * cfg["k"] * cfg["k"], d), patch_b=jnp.zeros((d,), jnp.float32),
            patch_ln_g=jnp.ones((d,), jnp.float32), patch_ln_b=jnp.zeros((d,), jnp.float32),
            ln1_g=jnp.ones((d,), jnp.float32), ln1_b=jnp.zeros((d,), jnp.float32),
            wq=nrm(d, d), bq=jnp.zeros((d,), jnp.float32),
            wk=nrm(d, d), bk=jnp.zeros((d,), jnp.float32),
            wv=nrm(d, d), bv=jnp.zeros((d,), jnp.float32),
            wo=nrm(d, d), bo=jnp.zeros((d,), jnp.float32),
            ln2_g=jnp.ones((d,), jnp.float32), ln2_b=jnp.zeros((d,), jnp.float32),
            fc1_w=nrm(d, hid), fc1_b=jnp.zeros((hid,), jnp.float32),
            dw_w=nrm(9, hid), dw_b=jnp.zeros((hid,), jnp.float32),
            fc2_w=nrm(hid, d), fc2_b=jnp.zeros((d,), jnp.float32),
            ln_out_g=jnp.ones((d,), jnp.float32), ln_out_b=jnp.zeros((d,), jnp.float32),
        )
        stages.append(st)
        cin = d
    return dict(
        stages=stages,
        dec_w=[nrm(cfg["dim"], DEC_DIM) for cfg in STAGE_CFG],
        dec_b=[jnp.zeros((DEC_DIM,), jnp.float32) for _ in STAGE_CFG],
        fuse_w=nrm(len(STAGE_CFG) * DEC_DIM, DEC_DIM),
        fuse_b=jnp.zeros((DEC_DIM,), jnp.float32),
        cls_w=nrm(DEC_DIM, NUM_CLASS),
        cls_b=jnp.zeros((NUM_CLASS,), jnp.float32),
    )


def prepare_params(params):
    """Fuse QKV weights (scale folded into Wq), fold the decode-head linear chain,
    and cast all MXU weights to bf16. Biases / LN params stay f32."""
    bf16 = jnp.bfloat16
    prep = {"stages": []}
    for cfg, st in zip(STAGE_CFG, params["stages"]):
        dim, heads = cfg["dim"], cfg["heads"]
        scale = 1.0 / ((dim // heads) ** 0.5)
        wqkv = jnp.concatenate([st["wq"] * scale, st["wk"], st["wv"]], axis=1)
        bqkv = jnp.concatenate([st["bq"] * scale, st["bk"], st["bv"]])
        prep["stages"].append(dict(
            patch_w=st["patch_w"].astype(bf16), patch_b=st["patch_b"],
            patch_ln_g=st["patch_ln_g"], patch_ln_b=st["patch_ln_b"],
            ln1_g=st["ln1_g"], ln1_b=st["ln1_b"],
            wqkv=wqkv.astype(bf16), bqkv=bqkv,
            wo=st["wo"].astype(bf16), bo=st["bo"],
            ln2_g=st["ln2_g"], ln2_b=st["ln2_b"],
            fc1_w=st["fc1_w"].astype(bf16), fc1_b=st["fc1_b"],
            dw_w=st["dw_w"], dw_b=st["dw_b"],
            fc2_w=st["fc2_w"].astype(bf16), fc2_b=st["fc2_b"],
            ln_out_g=st["ln_out_g"], ln_out_b=st["ln_out_b"],
        ))
    # decode head: HF concatenates deepest-first, i.e. fused = concat(dec[::-1]) @ fuse_w.
    # The chain dec_proj -> concat -> linear_fuse is purely linear, so fold it offline.
    ns = len(STAGE_CFG)
    fuse_w, fuse_b = params["fuse_w"], params["fuse_b"]
    dec_fold_w = [None] * ns
    dec_fold_b = fuse_b
    for slot, si in enumerate(range(ns)[::-1]):
        blk = fuse_w[slot * DEC_DIM:(slot + 1) * DEC_DIM]        # (DEC_DIM, DEC_DIM)
        dec_fold_w[si] = (params["dec_w"][si] @ blk).astype(bf16)
        dec_fold_b = dec_fold_b + params["dec_b"][si] @ blk
    prep["dec_fold_w"] = dec_fold_w
    prep["dec_fold_b"] = dec_fold_b
    prep["cls_w"] = params["cls_w"].astype(bf16)
    prep["cls_b"] = params["cls_b"]
    return prep


# ---------------------------------------------------------------------------
# Forward (mirrors SegFormer.forward: train -> (loss, logits), test -> (logits,))
# ---------------------------------------------------------------------------
def segformer_forward(params, images, masks=None, mode="train"):
    p = prepare_params(params)
    B = images.shape[0]
    x = images
    feats = []

    for cfg, st in zip(STAGE_CFG, p["stages"]):
        dim, heads = cfg["dim"], cfg["heads"]
        hd = dim // heads
        # overlap patch embedding (conv as im2col + fused Pallas matmul+LN)
        cols, Ho, Wo = im2col(x, cfg["k"], cfg["s"], cfg["p"])
        tok = pallas_matmul_ln(cols, st["patch_w"], st["patch_b"],
                               st["patch_ln_g"], st["patch_ln_b"])       # f32 residual

        # --- efficient self-attention (sr_ratio=1): LN1 fused into one wide QKV matmul ---
        qkv = pallas_ln_matmul(tok, st["ln1_g"], st["ln1_b"], st["wqkv"], st["bqkv"])
        q, k_, v_ = qkv[:, :dim], qkv[:, dim:2 * dim], qkv[:, 2 * dim:]

        def split_heads(t):
            return (t.reshape(B, Ho * Wo, heads, hd)
                     .transpose(0, 2, 1, 3)
                     .reshape(B * heads, Ho * Wo, hd))

        a = pallas_attention(split_heads(q), split_heads(k_), split_heads(v_))
        a = (a.reshape(B, heads, Ho * Wo, hd)
              .transpose(0, 2, 1, 3)
              .reshape(B * Ho * Wo, dim))
        tok = pallas_matmul_res(a, st["wo"], st["bo"], tok)              # +residual fused

        # --- Mix-FFN: (LN2+fc1 fused) -> depthwise 3x3 + GELU -> (fc2 + residual fused) ---
        hid = dim * cfg["mlp_ratio"]
        hdn = pallas_ln_matmul(tok, st["ln2_g"], st["ln2_b"], st["fc1_w"], st["fc1_b"])
        hdn = pallas_dwconv3x3_gelu(hdn.reshape(B, Ho, Wo, hid),
                                    st["dw_w"], st["dw_b"]).reshape(B * Ho * Wo, hid)
        tok = pallas_matmul_res(hdn, st["fc2_w"], st["fc2_b"], tok)

        tok = pallas_layernorm(tok, st["ln_out_g"], st["ln_out_b"])
        feat = tok.reshape(B, Ho, Wo, dim)
        feats.append(feat)
        x = feat.transpose(0, 3, 1, 2)          # NCHW for next stage's patch embed

    # --- all-MLP decode head: one fused kernel (dec->concat->fuse->ReLU->classifier) ---
    H1, W1 = feats[0].shape[1:3]
    xs = []
    for f in feats:
        Bf, Hf, Wf, Cf = f.shape
        if (Hf, Wf) != (H1, W1):
            f = jax.image.resize(f, (Bf, H1, W1, Cf), method="bilinear")
        xs.append(f.reshape(Bf * H1 * W1, Cf))
    logits = pallas_decode_head(xs, p["dec_fold_w"], p["dec_fold_b"],
                                p["cls_w"], p["cls_b"])
    logits = logits.reshape(B, H1, W1, NUM_CLASS).transpose(0, 3, 1, 2)  # NCHW

    if mode == "test" or masks is None:
        return (logits,)

    # loss: upsample logits to label resolution, CE with ignore_index=255
    Hl, Wl = masks.shape[1], masks.shape[2]
    up = jax.image.resize(logits, (B, NUM_CLASS, Hl, Wl), method="bilinear")
    logits_flat = up.transpose(0, 2, 3, 1).reshape(-1, NUM_CLASS)
    loss = pallas_cross_entropy(logits_flat, masks.reshape(-1))
    return (loss, logits)


if __name__ == "__main__":
    key = jax.random.PRNGKey(0)
    k_img, k_mask = jax.random.split(key)
    images = jax.random.normal(k_img, (2, 3, 16, 16), jnp.float32)          # NCHW
    masks = jax.random.randint(k_mask, (2, 16, 16), 0, NUM_CLASS)
    masks = masks.at[0, 0, 0].set(255)  # exercise ignore_index

    params = init_params(jax.random.PRNGKey(42))

    loss, logits = segformer_forward(params, images, masks, mode="train")
    jax.block_until_ready((loss, logits))
    (test_logits,) = segformer_forward(params, images, mode="test")
    jax.block_until_ready(test_logits)

    assert logits.shape == (2, NUM_CLASS, 4, 4)
    assert test_logits.shape == (2, NUM_CLASS, 4, 4)
    assert jnp.isfinite(loss)
    print("KERNEL_OK")
</pallas_src>

<mosaic_0001>
module attributes {stable_mosaic.version = 11 : i64} {
  func.func @_mm_ln_kernel(%arg0: i32, %arg1: memref<32x147xbf16, #tpu.memory_space<vmem>>, %arg2: memref<147x32xbf16, #tpu.memory_space<vmem>>, %arg3: memref<1x32xf32, #tpu.memory_space<vmem>>, %arg4: memref<1x32xf32, #tpu.memory_space<vmem>>, %arg5: memref<1x32xf32, #tpu.memory_space<vmem>>, %arg6: memref<32x32xf32, #tpu.memory_space<vmem>>) attributes {dimension_semantics = [#tpu.dimension_semantics<parallel>], iteration_bounds = array<i64: 1>, scalar_prefetch = 0 : i64, scratch_operands = 0 : i64, tpu.core_type = #tpu.core_type<tc>, window_params = [{transform_indices = @transform_0, window_bounds = array<i64: 32, 147>}, {pipeline_mode = #tpu.pipeline_mode<synchronous>, transform_indices = @transform_1, window_bounds = array<i64: 147, 32>}, {pipeline_mode = #tpu.pipeline_mode<synchronous>, transform_indices = @transform_2, window_bounds = array<i64: 1, 32>}, {pipeline_mode = #tpu.pipeline_mode<synchronous>, transform_indices = @transform_3, window_bounds = array<i64: 1, 32>}, {pipeline_mode = #tpu.pipeline_mode<synchronous>, transform_indices = @transform_4, window_bounds = array<i64: 1, 32>}, {transform_indices = @transform_5, window_bounds = array<i64: 32, 32>}]} {
    %c0 = arith.constant 0 : index
    %c0_0 = arith.constant 0 : index
    %0 = vector.load %arg1[%c0, %c0_0] : memref<32x147xbf16, #tpu.memory_space<vmem>>, vector<32x147xbf16>
    %c0_1 = arith.constant 0 : index
    %c0_2 = arith.constant 0 : index
    %1 = vector.load %arg2[%c0_1, %c0_2] : memref<147x32xbf16, #tpu.memory_space<vmem>>, vector<147x32xbf16>
    %cst = arith.constant dense<0.000000e+00> : vector<32x32xf32>
    %2 = tpu.matmul %0, %1, %cst {dimension_numbers = #tpu.dot_dimension_numbers<[1], [0], [0], [1], [0, 0, 1, 1], [], []>} : vector<32x147xbf16>, vector<147x32xbf16>, vector<32x32xf32> -> vector<32x32xf32>
    %c0_3 = arith.constant 0 : index
    %c0_4 = arith.constant 0 : index
    %3 = vector.load %arg3[%c0_3, %c0_4] : memref<1x32xf32, #tpu.memory_space<vmem>>, vector<1x32xf32>
    %4 = vector.broadcast %3 : vector<1x32xf32> to vector<32x32xf32>
    %5 = arith.addf %2, %4 : vector<32x32xf32>
    %cst_5 = arith.constant dense<0.000000e+00> : vector<32xf32>
    %6 = vector.multi_reduction <add>, %5, %cst_5 [1] : vector<32x32xf32> to vector<32xf32>
    %7 = vector.shape_cast %6 : vector<32xf32> to vector<32x1xf32>
    %cst_6 = arith.constant 3.200000e+01 : f32
    %8 = vector.broadcast %cst_6 : f32 to vector<32x1xf32>
    %9 = arith.divf %7, %8 : vector<32x1xf32>
    %10 = vector.broadcast %9 : vector<32x1xf32> to vector<32x32xf32>
    %11 = arith.subf %5, %10 : vector<32x32xf32>
    %12 = arith.mulf %11, %11 : vector<32x32xf32>
    %cst_7 = arith.constant dense<0.000000e+00> : vector<32xf32>
    %13 = vector.multi_reduction <add>, %12, %cst_7 [1] : vector<32x32xf32> to vector<32xf32>
    %14 = vector.shape_cast %13 : vector<32xf32> to vector<32x1xf32>
    %cst_8 = arith.constant 3.200000e+01 : f32
    %15 = vector.broadcast %cst_8 : f32 to vector<32x1xf32>
    %16 = arith.divf %14, %15 : vector<32x1xf32>
    %17 = vector.broadcast %9 : vector<32x1xf32> to vector<32x32xf32>
    %18 = arith.subf %5, %17 : vector<32x32xf32>
    %cst_9 = arith.constant 9.99999997E-7 : f32
    %19 = vector.broadcast %cst_9 : f32 to vector<32x1xf32>
    %20 = arith.addf %16, %19 : vector<32x1xf32>
    %21 = math.rsqrt %20 : vector<32x1xf32>
    %22 = vector.broadcast %21 : vector<32x1xf32> to vector<32x32xf32>
    %23 = arith.mulf %18, %22 : vector<32x32xf32>
    %c0_10 = arith.constant 0 : index
    %c0_11 = arith.constant 0 : index
    %24 = vector.load %arg4[%c0_10, %c0_11] : memref<1x32xf32, #tpu.memory_space<vmem>>, vector<1x32xf32>
    %25 = vector.broadcast %24 : vector<1x32xf32> to vector<32x32xf32>
    %26 = arith.mulf %23, %25 : vector<32x32xf32>
    %c0_12 = arith.constant 0 : index
    %c0_13 = arith.constant 0 : index
    %27 = vector.load %arg5[%c0_12, %c0_13] : memref<1x32xf32, #tpu.memory_space<vmem>>, vector<1x32xf32>
    %28 = vector.broadcast %27 : vector<1x32xf32> to vector<32x32xf32>
    %29 = arith.addf %26, %28 : vector<32x32xf32>
    %c0_14 = arith.constant 0 : index
    %c0_15 = arith.constant 0 : index
    %30 = vector.load %arg6[%c0_14, %c0_15] : memref<32x32xf32, #tpu.memory_space<vmem>>, vector<32x32xf32>
    tpu.vector_store %arg6[%c0_14, %c0_15], %29 {strides = array<i32>} : memref<32x32xf32, #tpu.memory_space<vmem>>, vector<32x32xf32>,
    return
  }
  func.func @transform_0(%arg0: i32) -> (i32, i32) {
    %c0_i32 = arith.constant 0 : i32
    %c0_i32_0 = arith.constant 0 : i32
    return %arg0, %c0_i32 : i32, i32
  }
  func.func @transform_1(%arg0: i32) -> (i32, i32) {
    %c0_i32 = arith.constant 0 : i32
    %c0_i32_0 = arith.constant 0 : i32
    %c0_i32_1 = arith.constant 0 : i32
    return %c0_i32, %c0_i32_0 : i32, i32
  }
  func.func @transform_2(%arg0: i32) -> (i32, i32) {
    %c0_i32 = arith.constant 0 : i32
    %c0_i32_0 = arith.constant 0 : i32
    %c0_i32_1 = arith.constant 0 : i32
    return %c0_i32, %c0_i32_0 : i32, i32
  }
  func.func @transform_3(%arg0: i32) -> (i32, i32) {
    %c0_i32 = arith.constant 0 : i32
    %c0_i32_0 = arith.constant 0 : i32
    %c0_i32_1 = arith.constant 0 : i32
    return %c0_i32, %c0_i32_0 : i32, i32
  }
  func.func @transform_4(%arg0: i32) -> (i32, i32) {
    %c0_i32 = arith.constant 0 : i32
    %c0_i32_0 = arith.constant 0 : i32
    %c0_i32_1 = arith.constant 0 : i32
    return %c0_i32, %c0_i32_0 : i32, i32
  }
  func.func @transform_5(%arg0: i32) -> (i32, i32) {
    %c0_i32 = arith.constant 0 : i32
    %c0_i32_0 = arith.constant 0 : i32
    return %arg0, %c0_i32 : i32, i32
  }
}

</mosaic_0001>

<llo_original>
// kernel: tpu_custom_call.1
$region0: #{tpu_custom_call.1}
  #allocation0 [shape = 'u32[]', space=smem, size = 0x4, offset = 0x4, fixed_abs, tag = 'smem constant byte address 0x4 - core index']
  #allocation1 [shape = 'u32[144,128]{1,0:T(1,128)}', space=vmem, size = 0x12000, scoped, tag = 'internal scratch']
  %s0 = inlined_call_operand.vmem [shape: bf16[32,147], index: 0, kind: input, shape index: {}]
  %s1 = inlined_call_operand.vmem [shape: bf16[147,32], index: 1, kind: input, shape index: {}]
  %s2 = inlined_call_operand.vmem [shape: f32[1,32], index: 2, kind: input, shape index: {}]
  %s3 = inlined_call_operand.vmem [shape: f32[1,32], index: 3, kind: input, shape index: {}]
  %s4 = inlined_call_operand.vmem [shape: f32[1,32], index: 4, kind: input, shape index: {}]
  %s5 = inlined_call_operand.hbm [shape: f32[32,32], index: 5, kind: output, shape index: {}]
  %s6 = sld [smem:[#allocation0]]
  $region30: #{tpu_custom_call.1} parent=0
    _
  %s8 = ssub.s32 1, %s6
  %s9 = scalar_select 0, %s8, %s6
  $region1: #{tpu_custom_call.1} parent=0
    #allocation2 [shape = 'u8[16384]{0}', space=vmem, size = 0x4000, scoped, tag = 'output window, operand 0, single buffered']
    #allocation3 [shape = 's32[1]{0}', space=sflag, size = 0x4, scoped, tag = 'scoped memory for tpu_custom_call.1']
    %10 = vsyncpa [#allocation3], 0
    // Predicated region
    $region2: #{tpu_custom_call.1} parent=1 // pred_check
      _
    $region3: #{tpu_custom_call.1} parent=1 // pred_check_branch
      %12 = sbr.rel (0) target = $region5
    $region4: #{tpu_custom_call.1} parent=1 // pred_region
      _
    $region5: #{tpu_custom_call.1} parent=1 // pred_fallthru
      _
    // Predicated region
    $region6: #{tpu_custom_call.1} parent=1 // pred_check
      _
    $region7: #{tpu_custom_call.1} parent=1 // pred_check_branch
      %14 = sbr.rel (0) target = $region9
    $region8: #{tpu_custom_call.1} parent=1 // pred_region
      _
    $region9: #{tpu_custom_call.1} parent=1 // pred_fallthru
      _
    // Predicated region
    $region10: #{tpu_custom_call.1} parent=1 // pred_check
      _
    $region11: #{tpu_custom_call.1} parent=1 // pred_check_branch
      %16 = sbr.rel (0) target = $region13
    $region12: #{tpu_custom_call.1} parent=1 // pred_region
      _
    $region13: #{tpu_custom_call.1} parent=1 // pred_fallthru
      _
    // Predicated region
    $region14: #{tpu_custom_call.1} parent=1 // pred_check
      _
    $region15: #{tpu_custom_call.1} parent=1 // pred_check_branch
      %18 = sbr.rel (0) target = $region17
    $region16: #{tpu_custom_call.1} parent=1 // pred_region
      _
    $region17: #{tpu_custom_call.1} parent=1 // pred_fallthru
      _
    // Predicated region
    $region18: #{tpu_custom_call.1} parent=1 // pred_check
      _
    $region19: #{tpu_custom_call.1} parent=1 // pred_check_branch
      %20 = sbr.rel (0) target = $region21
    $region20: #{tpu_custom_call.1} parent=1 // pred_region
      _
    $region21: #{tpu_custom_call.1} parent=1 // pred_fallthru
      _
    %v22 = vld [vmem:[%s0] sm:$0xff]
    %v23 = vld [vmem:[%s0 + $0x8] sm:$0xff]
    %v24 = vld [vmem:[%s0 + $0x10] sm:$0xff]
    %v25 = vld [vmem:[%s0 + $0x18] sm:$0xff]
    %v26 = vld [vmem:[%s1] sm:$0xf]
    %v27 = vld [vmem:[%s1 + $0x4] sm:$0xf]
    %v28 = vld [vmem:[%s1 + $0x8] sm:$0xf]
    %v29 = vld [vmem:[%s1 + $0xc] sm:$0xf]
    %v30 = vld [vmem:[%s1 + $0x10] sm:$0xf]
    %v31 = vld [vmem:[%s1 + $0x14] sm:$0xf]
    %v32 = vld [vmem:[%s1 + $0x18] sm:$0xf]
    %v33 = vld [vmem:[%s1 + $0x1c] sm:$0xf]
    %v34 = vld [vmem:[%s1 + $0x20] sm:$0xf]
    %v35 = vld [vmem:[%s1 + $0x24] sm:$0xf]
    %v36 = vld [vmem:[%s1 + $0x28] sm:$0xf]
    %v37 = vld [vmem:[%s1 + $0x2c] sm:$0xf]
    %v38 = vld [vmem:[%s1 + $0x30] sm:$0xf]
    %v39 = vld [vmem:[%s1 + $0x34] sm:$0xf]
    %v40 = vld [vmem:[%s1 + $0x38] sm:$0xf]
    %v41 = vld [vmem:[%s1 + $0x3c] sm:$0xf]
    %v42 = vld [vmem:[%s1 + $0x40] sm:$0xf]
    %v43 = vld [vmem:[%s1 + $0x44] sm:$0xf]
    %v44 = vld [vmem:[%s1 + $0x48] sm:$0x3]
    %v45 = vld [vmem:[%s2] sm:$0x1]
    %v47 = vlaneseq
    %v48 = vshrl.u32 %v47, 7
    %v49 = vsub.s32 0, %v48
    %v50 = vrot.slane %v45, %v49
    %v56 = vunpack.c.l.b16 %v22
    %v57 = vunpack.c.h.b16 %v22
    %v58 = vunpack.c.l.b16 %v23
    %v59 = vunpack.c.h.b16 %v23
    %v60 = vunpack.c.l.b16 %v24
    %v61 = vunpack.c.h.b16 %v24
    %v62 = vunpack.c.l.b16 %v25
    %v63 = vunpack.c.h.b16 %v25
    %v64 = vpack.c.b16 %v58, %v56
    %v65 = vpack.c.b16 %v59, %v57
    %v66 = vpack.c.b16 %v62, %v60
    %v67 = vpack.c.b16 %v63, %v61
    %v89 = vunpack.c.l.b16 %v26
    %v90 = vunpack.c.l.b16 %v27
    %v91 = vunpack.c.l.b16 %v28
    %v92 = vunpack.c.l.b16 %v29
    %v93 = vunpack.c.l.b16 %v30
    %v94 = vunpack.c.l.b16 %v31
    %v95 = vunpack.c.l.b16 %v32
    %v96 = vunpack.c.l.b16 %v33
    %v97 = vunpack.c.l.b16 %v34
    %v98 = vunpack.c.l.b16 %v35
    %v99 = vunpack.c.l.b16 %v36
    %v100 = vunpack.c.l.b16 %v37
    %v101 = vunpack.c.l.b16 %v38
    %v102 = vunpack.c.l.b16 %v39
    %v103 = vunpack.c.l.b16 %v40
    %v104 = vunpack.c.l.b16 %v41
    %v105 = vunpack.c.l.b16 %v42
    %v106 = vunpack.c.l.b16 %v43
    %v107 = vunpack.c.l.b16 %v44
    %v108 = vpack.c.b16 %v90, %v89
    %v109 = vpack.c.b16 %v92, %v91
    %v110 = vpack.c.b16 %v94, %v93
    %v111 = vpack.c.b16 %v96, %v95
    %v112 = vpack.c.b16 %v98, %v97
    %v113 = vpack.c.b16 %v100, %v99
    %v114 = vpack.c.b16 %v102, %v101
    %v115 = vpack.c.b16 %v104, %v103
    %v116 = vpack.c.b16 %v106, %v105
    %v117 = vpack.c.b16 %v107, %v107
    %vm127 = vcmask 154624
    %v129 = vsel %vm127, %v65, 0
    %v132 = vsel %vm127, %v67, 0
    %vm134 = vcmask 1040384
    %vm135 = vcmask 1041408
    %v136 = vsel %vm134, 4294967295, 65535
    %v137 = vsel %vm135, %v136, 0
    %v139 = vand.u32 %v117, %v137
    %141 = vmatprep.subr.bf16.mxu0 0
    %142 = vmatpush1.bf16.msra.mxu0 %v108
    %143 = vmatprep.subr.bf16.mxu0 0
    %144 = vmatpush1.bf16.msra.mxu0 %v109
    %145 = vmatprep.subr.bf16.mxu0 0
    %146 = vmatpush1.bf16.msra.mxu0 %v110
    %147 = vmatprep.subr.bf16.mxu0 0
    %148 = vmatpush1.bf16.msra.mxu0 %v111
    %149 = vmatprep.subr.bf16.mxu0 0
    %150 = vmatpush1.bf16.msra.mxu0 %v112
    %151 = vmatprep.subr.bf16.mxu0 0
    %152 = vmatpush1.bf16.msra.mxu0 %v113
    %153 = vmatprep.subr.bf16.mxu0 0
    %154 = vmatpush1.bf16.msra.mxu0 %v114
    %155 = vmatprep.subr.bf16.mxu0 0
    %156 = vmatpush1.bf16.msra.mxu0 %v115
    %157 = vmatprep.subr.bf16.mxu0 0
    %158 = vmatpush1.bf16.msra.mxu0 %v116
    %159 = vmatprep.subr.bf16.mxu0 0
    %160 = vmatpush1.bf16.msra.mxu0 %v139
    %161 = vmatprep.subr.bf16.mxu0 0
    %162 = vmatpush1.bf16.msra.mxu0 0
    %163 = vmatprep.subr.bf16.mxu0 0
    %164 = vmatpush1.bf16.msra.mxu0 0
    %165 = vmatprep.subr.bf16.mxu0 0
    %166 = vmatpush1.bf16.msra.mxu0 0
    %167 = vmatprep.subr.bf16.mxu0 0
    %168 = vmatpush1.bf16.msra.mxu0 0
    %169 = vmatprep.subr.bf16.mxu0 0
    %170 = vmatpush1.bf16.msra.mxu0 0
    %171 = vmatprep.subr.bf16.mxu0 0
    %172 = vmatpush1.bf16.msra.mxu0 0
    %173 = vmatprep.mubr.bf16.mxu0 %v129
    %174 = vmatmul.mubr.bf16.gmra.mrb[0].mxu0 %v64
    %v175 = vpop.f32.mrb[0].mxu0
    %v176 = vadd.f32 %v50, %v175
    %v177 = vpop.f32.mrb[0].mxu0
    %v178 = vpop.f32.mrb[0].mxu0
    %v179 = vadd.f32 %v50, %v178
    %v180 = vpop.f32.mrb[0].mxu0
    %181 = vmatprep.mubr.bf16.mxu0 %v132
    %182 = vmatmul.mubr.bf16.gmra.mrb[0].mxu0 %v66
    %v183 = vpop.f32.mrb[0].mxu0
    %v184 = vadd.f32 %v50, %v183
    %v185 = vpop.f32.mrb[0].mxu0
    %v186 = vpop.f32.mrb[0].mxu0
    %v187 = vadd.f32 %v50, %v186
    %v188 = vpop.f32.mrb[0].mxu0
    %189 = vdwg.mxu0
    %vm190 = vcmask 261120
    %v191 = vsel %vm190, %v176, 0.0
    %192 = vadd.xlane.f32.xlu0 %v191
    %v193 = vpop.xlane.xlu0 %192
    %v194 = vsel %vm190, %v179, 0.0
    %195 = vadd.xlane.f32.xlu0 %v194
    %v196 = vpop.xlane.xlu0 %195
    %v197 = vsel %vm190, %v184, 0.0
    %198 = vadd.xlane.f32.xlu0 %v197
    %v199 = vpop.xlane.xlu0 %198
    %v200 = vsel %vm190, %v187, 0.0
    %201 = vadd.xlane.f32.xlu0 %v200
    %v202 = vpop.xlane.xlu0 %201
    %v203 = vrcp.pop 32.0
    %v204 = vmul.f32 %v193, %v203
    %v205 = vmul.f32 %v196, %v203
    %v206 = vmul.f32 %v199, %v203
    %v207 = vmul.f32 %v202, %v203
    %v208 = vsub.f32 %v176, %v204
    %v209 = vsub.f32 %v179, %v205
    %v210 = vsub.f32 %v184, %v206
    %v211 = vsub.f32 %v187, %v207
    %v212 = vmul.f32 %v208, %v208
    %v213 = vmul.f32 %v209, %v209
    %v214 = vmul.f32 %v210, %v210
    %v215 = vmul.f32 %v211, %v211
    %v216 = vsel %vm190, %v212, 0.0
    %217 = vadd.xlane.f32.xlu0 %v216
    %v218 = vpop.xlane.xlu0 %217
    %v219 = vsel %vm190, %v213, 0.0
    %220 = vadd.xlane.f32.xlu0 %v219
    %v221 = vpop.xlane.xlu0 %220
    %v222 = vsel %vm190, %v214, 0.0
    %223 = vadd.xlane.f32.xlu0 %v222
    %v224 = vpop.xlane.xlu0 %223
    %v225 = vsel %vm190, %v215, 0.0
    %226 = vadd.xlane.f32.xlu0 %v225
    %v227 = vpop.xlane.xlu0 %226
    %v228 = vmul.f32 %v218, %v203
    %v229 = vmul.f32 %v221, %v203
    %v230 = vmul.f32 %v224, %v203
    %v231 = vmul.f32 %v227, %v203
    %v232 = vadd.f32 %v228, 1e-06
    %v233 = vadd.f32 %v229, 1e-06
    %v234 = vadd.f32 %v230, 1e-06
    %v235 = vadd.f32 %v231, 1e-06
    %v236 = vrsqrt.pop %v232
    %v237 = vrsqrt.pop %v233
    %v238 = vrsqrt.pop %v234
    %v239 = vrsqrt.pop %v235
    %v240 = vmul.f32 %v208, %v236
    %v241 = vmul.f32 %v209, %v237
    %v242 = vmul.f32 %v210, %v238
    %v243 = vmul.f32 %v211, %v239
    %v244 = vld [vmem:[%s3] sm:$0x1]
    %v246 = vlaneseq
    %v247 = vshrl.u32 %v246, 7
    %v248 = vsub.s32 0, %v247
    %v249 = vrot.slane %v244, %v248
    %v251 = vmul.f32 %v240, %v249
    %v252 = vmul.f32 %v241, %v249
    %v253 = vmul.f32 %v242, %v249
    %v254 = vmul.f32 %v243, %v249
    %v255 = vld [vmem:[%s4] sm:$0x1]
    %v257 = vlaneseq
    %v258 = vshrl.u32 %v257, 7
    %v259 = vsub.s32 0, %v258
    %v260 = vrot.slane %v255, %v259
    %v262 = vadd.f32 %v251, %v260
    %v263 = vadd.f32 %v252, %v260
    %v264 = vadd.f32 %v253, %v260
    %v265 = vadd.f32 %v254, %v260
    %266 = vst.msk [vmem:[#allocation2] sm:$0xff] %vm190, %v262
    %267 = vst.msk [vmem:[#allocation2 + $0x8] sm:$0xff] %vm190, %v263
    %268 = vst.msk [vmem:[#allocation2 + $0x10] sm:$0xff] %vm190, %v264
    %269 = vst.msk [vmem:[#allocation2 + $0x18] sm:$0xff] %vm190, %v265
    // Predicated region
    $region22: #{tpu_custom_call.1} parent=1 // pred_check
      _
    $region23: #{tpu_custom_call.1} parent=1 // pred_check_branch
      %271 = sbr.rel (0) target = $region25
    $region24: #{tpu_custom_call.1} parent=1 // pred_region
      %s273 = ssub.s32 512, 512
      %274 = vsyncadd [#allocation3], %s273
      %s275 = sshll.u32 [#allocation2], 4
      %s276 = int_to_ptr.vmem [resolvable:$true] %s275
      %281 = dma.vmem_to_hbm [thread:$0]  %s276, 512, %s5, [#allocation3], 128, 128, 8
    $region25: #{tpu_custom_call.1} parent=1 // pred_fallthru
      _
    // Predicated region
    $region26: #{tpu_custom_call.1} parent=1 // pred_check
      _
    $region27: #{tpu_custom_call.1} parent=1 // pred_check_branch
      %283 = sbr.rel (0) target = $region29
    $region28: #{tpu_custom_call.1} parent=1 // pred_region
      %284 = dma.done [#allocation3], 512
    $region29: #{tpu_custom_call.1} parent=1 // pred_fallthru
      _
    %285 = vsyncpa [#allocation3], 1

</llo_original>
